<compile_context>
chip_gen: v7x
topology: tpu7x:2x2x1
jax: 0.10.0
libtpu: 0.0.40
codegen_flags: <defaults>
</compile_context>

<pallas_src>
import numpy as np
import jax
import jax.numpy as jnp
from jax.experimental import pallas as pl
from jax.experimental.pallas import tpu as pltpu


# ----------------------------- Pallas kernel ------------------------------- #

def channel_attention_kernel(x_ref, w1_ref, w2_ref, o_ref):
    # x_ref : (1, C, HW)  one batch element, spatial flattened onto lanes
    # w1_ref: (Cmid, C)   Conv2d(C, C//ratio, 1, bias=False).weight squeezed
    # w2_ref: (C, Cmid)   Conv2d(C//ratio, C, 1, bias=False).weight squeezed
    # o_ref : (1, C, 1)   channel attention map for this batch element
    _, C, HW = x_ref.shape
    x = x_ref[0]                                              # (C, HW)

    # Global average + max pooling over the spatial (lane) axis.
    avg = jnp.sum(x, axis=1, keepdims=True) * (1.0 / HW)      # (C, 1)
    mx = jnp.max(x, axis=1, keepdims=True)                    # (C, 1)

    w1 = w1_ref[...]                                          # (Cmid, C)
    w2 = w2_ref[...]                                          # (C, Cmid)

    def shared_mlp(p):                                        # p: (C, 1)
        h = jnp.dot(w1, p, preferred_element_type=jnp.float32)    # (Cmid, 1)
        h = jnp.maximum(h, 0.0)                                    # ReLU
        return jnp.dot(w2, h, preferred_element_type=jnp.float32)  # (C, 1)

    z = shared_mlp(avg) + shared_mlp(mx)                      # (C, 1)
    att = 1.0 / (1.0 + jnp.exp(-z))                           # sigmoid
    o_ref[...] = att.reshape(1, C, 1)


# ------------------------------- Wrapper ----------------------------------- #

def channel_attention_forward(x_nchw, w1, w2):
    """x_nchw: (N, C, H, W); w1: (Cmid, C); w2: (C, Cmid). Returns (N, C, 1, 1)."""
    N, C, H, W = x_nchw.shape
    Cmid = w1.shape[0]
    HW = H * W
    x = x_nchw.reshape(N, C, HW).astype(jnp.float32)          # contiguous, free

    out = pl.pallas_call(
        channel_attention_kernel,
        out_shape=jax.ShapeDtypeStruct((N, C, 1), jnp.float32),
        grid=(N,),
        in_specs=[
            pl.BlockSpec((1, C, HW), lambda n: (n, 0, 0)),
            pl.BlockSpec((Cmid, C), lambda n: (0, 0)),
            pl.BlockSpec((C, Cmid), lambda n: (0, 0)),
        ],
        out_specs=pl.BlockSpec((1, C, 1), lambda n: (n, 0, 0)),
        compiler_params=pltpu.CompilerParams(dimension_semantics=("parallel",)),
    )(x, w1, w2)
    return out.reshape(N, C, 1, 1)


# ---------------------------- NumPy reference ------------------------------- #

def reference_forward(x, w1, w2):
    x = np.asarray(x, np.float32)
    w1 = np.asarray(w1, np.float32)    # (Cmid, C)
    w2 = np.asarray(w2, np.float32)    # (C, Cmid)

    avg = x.mean(axis=(2, 3))          # (N, C)  AdaptiveAvgPool2d(1)
    mx = x.max(axis=(2, 3))            # (N, C)  AdaptiveMaxPool2d(1)

    def mlp(p):                        # p: (N, C)
        h = np.maximum(p @ w1.T, 0.0)  # (N, Cmid)
        return h @ w2.T                # (N, C)

    z = mlp(avg) + mlp(mx)
    att = 1.0 / (1.0 + np.exp(-z))     # sigmoid
    return att.reshape(x.shape[0], x.shape[1], 1, 1)


# ----------------------------------- Main ----------------------------------- #

if __name__ == "__main__":
    N, C, H, W = 2, 64, 16, 16
    ratio = 16
    Cmid = C // ratio                  # = 4

    key = jax.random.PRNGKey(0)
    kx, k1, k2 = jax.random.split(key, 3)
    x = jax.random.normal(kx, (N, C, H, W), jnp.float32)
    # PyTorch Conv2d(C, Cmid, 1, bias=False).weight has shape (Cmid, C, 1, 1);
    # we store the squeezed (Cmid, C) and (C, Cmid) matrices directly.
    w1 = 0.2 * jax.random.normal(k1, (Cmid, C), jnp.float32)
    w2 = 0.2 * jax.random.normal(k2, (C, Cmid), jnp.float32)

    out = channel_attention_forward(x, w1, w2)
    out = jax.block_until_ready(out)

    ref = reference_forward(x, w1, w2)
    assert out.shape == ref.shape == (N, C, 1, 1), (out.shape, ref.shape)
    np.testing.assert_allclose(np.asarray(out), ref, rtol=2e-2, atol=2e-2)

    print("KERNEL_OK")
</pallas_src>

<mosaic_0001>
module attributes {stable_mosaic.version = 11 : i64} {
  func.func @channel_attention_kernel(%arg0: i32, %arg1: memref<1x64x256xf32, #tpu.memory_space<vmem>>, %arg2: memref<4x64xf32, #tpu.memory_space<vmem>>, %arg3: memref<64x4xf32, #tpu.memory_space<vmem>>, %arg4: memref<1x64x1xf32, #tpu.memory_space<vmem>>) attributes {dimension_semantics = [#tpu.dimension_semantics<parallel>], iteration_bounds = array<i64: 2>, scalar_prefetch = 0 : i64, scratch_operands = 0 : i64, tpu.core_type = #tpu.core_type<tc>, window_params = [{transform_indices = @transform_0, window_bounds = array<i64: 1, 64, 256>}, {pipeline_mode = #tpu.pipeline_mode<synchronous>, transform_indices = @transform_1, window_bounds = array<i64: 4, 64>}, {pipeline_mode = #tpu.pipeline_mode<synchronous>, transform_indices = @transform_2, window_bounds = array<i64: 64, 4>}, {transform_indices = @transform_3, window_bounds = array<i64: 1, 64, 1>}]} {
    %c0 = arith.constant 0 : index
    %c0_0 = arith.constant 0 : index
    %c0_1 = arith.constant 0 : index
    %0 = vector.load %arg1[%c0, %c0_0, %c0_1] : memref<1x64x256xf32, #tpu.memory_space<vmem>>, vector<1x64x256xf32>
    %1 = vector.shape_cast %0 : vector<1x64x256xf32> to vector<64x256xf32>
    %cst = arith.constant dense<0.000000e+00> : vector<64xf32>
    %2 = vector.multi_reduction <add>, %1, %cst [1] : vector<64x256xf32> to vector<64xf32>
    %3 = vector.shape_cast %2 : vector<64xf32> to vector<64x1xf32>
    %cst_2 = arith.constant 3.906250e-03 : f32
    %4 = vector.broadcast %cst_2 : f32 to vector<64x1xf32>
    %5 = arith.mulf %3, %4 : vector<64x1xf32>
    %cst_3 = arith.constant dense<0xFF800000> : vector<64xf32>
    %6 = vector.multi_reduction <maximumf>, %1, %cst_3 [1] : vector<64x256xf32> to vector<64xf32>
    %7 = vector.shape_cast %6 : vector<64xf32> to vector<64x1xf32>
    %c0_4 = arith.constant 0 : index
    %c0_5 = arith.constant 0 : index
    %8 = vector.load %arg2[%c0_4, %c0_5] : memref<4x64xf32, #tpu.memory_space<vmem>>, vector<4x64xf32>
    %c0_6 = arith.constant 0 : index
    %c0_7 = arith.constant 0 : index
    %9 = vector.load %arg3[%c0_6, %c0_7] : memref<64x4xf32, #tpu.memory_space<vmem>>, vector<64x4xf32>
    %cst_8 = arith.constant dense<0.000000e+00> : vector<4x1xf32>
    %10 = tpu.matmul %8, %5, %cst_8 {dimension_numbers = #tpu.dot_dimension_numbers<[1], [0], [0], [1], [0, 0, 1, 1], [], []>} : vector<4x64xf32>, vector<64x1xf32>, vector<4x1xf32> -> vector<4x1xf32>
    %cst_9 = arith.constant 0.000000e+00 : f32
    %11 = vector.broadcast %cst_9 : f32 to vector<4x1xf32>
    %12 = arith.maximumf %10, %11 : vector<4x1xf32>
    %cst_10 = arith.constant dense<0.000000e+00> : vector<64x1xf32>
    %13 = tpu.matmul %9, %12, %cst_10 {dimension_numbers = #tpu.dot_dimension_numbers<[1], [0], [0], [1], [0, 0, 1, 1], [], []>} : vector<64x4xf32>, vector<4x1xf32>, vector<64x1xf32> -> vector<64x1xf32>
    %cst_11 = arith.constant dense<0.000000e+00> : vector<4x1xf32>
    %14 = tpu.matmul %8, %7, %cst_11 {dimension_numbers = #tpu.dot_dimension_numbers<[1], [0], [0], [1], [0, 0, 1, 1], [], []>} : vector<4x64xf32>, vector<64x1xf32>, vector<4x1xf32> -> vector<4x1xf32>
    %cst_12 = arith.constant 0.000000e+00 : f32
    %15 = vector.broadcast %cst_12 : f32 to vector<4x1xf32>
    %16 = arith.maximumf %14, %15 : vector<4x1xf32>
    %cst_13 = arith.constant dense<0.000000e+00> : vector<64x1xf32>
    %17 = tpu.matmul %9, %16, %cst_13 {dimension_numbers = #tpu.dot_dimension_numbers<[1], [0], [0], [1], [0, 0, 1, 1], [], []>} : vector<64x4xf32>, vector<4x1xf32>, vector<64x1xf32> -> vector<64x1xf32>
    %18 = arith.addf %13, %17 : vector<64x1xf32>
    %cst_14 = arith.constant 0.000000e+00 : f32
    %19 = vector.broadcast %cst_14 : f32 to vector<64x1xf32>
    %20 = arith.subf %19, %18 : vector<64x1xf32>
    %21 = math.exp %20 : vector<64x1xf32>
    %cst_15 = arith.constant 1.000000e+00 : f32
    %22 = vector.broadcast %cst_15 : f32 to vector<64x1xf32>
    %23 = arith.addf %22, %21 : vector<64x1xf32>
    %cst_16 = arith.constant 1.000000e+00 : f32
    %24 = vector.broadcast %cst_16 : f32 to vector<64x1xf32>
    %25 = arith.divf %24, %23 : vector<64x1xf32>
    %26 = vector.shape_cast %25 : vector<64x1xf32> to vector<1x64x1xf32>
    %c0_17 = arith.constant 0 : index
    %c0_18 = arith.constant 0 : index
    %c0_19 = arith.constant 0 : index
    %27 = vector.load %arg4[%c0_17, %c0_18, %c0_19] : memref<1x64x1xf32, #tpu.memory_space<vmem>>, vector<1x64x1xf32>
    tpu.vector_store %arg4[%c0_17, %c0_18, %c0_19], %26 {strides = array<i32>} : memref<1x64x1xf32, #tpu.memory_space<vmem>>, vector<1x64x1xf32>,
    return
  }
  func.func @transform_0(%arg0: i32) -> (i32, i32, i32) {
    %c0_i32 = arith.constant 0 : i32
    %c0_i32_0 = arith.constant 0 : i32
    %c0_i32_1 = arith.constant 0 : i32
    return %arg0, %c0_i32, %c0_i32_0 : i32, i32, i32
  }
  func.func @transform_1(%arg0: i32) -> (i32, i32) {
    %c0_i32 = arith.constant 0 : i32
    %c0_i32_0 = arith.constant 0 : i32
    %c0_i32_1 = arith.constant 0 : i32
    return %c0_i32, %c0_i32_0 : i32, i32
  }
  func.func @transform_2(%arg0: i32) -> (i32, i32) {
    %c0_i32 = arith.constant 0 : i32
    %c0_i32_0 = arith.constant 0 : i32
    %c0_i32_1 = arith.constant 0 : i32
    return %c0_i32, %c0_i32_0 : i32, i32
  }
  func.func @transform_3(%arg0: i32) -> (i32, i32, i32) {
    %c0_i32 = arith.constant 0 : i32
    %c0_i32_0 = arith.constant 0 : i32
    %c0_i32_1 = arith.constant 0 : i32
    return %arg0, %c0_i32, %c0_i32_0 : i32, i32, i32
  }
}

</mosaic_0001>

<llo_original>
// kernel: tpu_custom_call.1
$region0: #{tpu_custom_call.1}
  #allocation0 [shape = 'u32[]', space=smem, size = 0x4, offset = 0x4, fixed_abs, tag = 'smem constant byte address 0x4 - core index']
  #allocation1 [shape = 'u32[144,128]{1,0:T(1,128)}', space=vmem, size = 0x12000, scoped, tag = 'internal scratch']
  %s0 = inlined_call_operand.hbm [shape: f32[2,64,256], index: 0, kind: input, shape index: {}]
  %s1 = inlined_call_operand.vmem [shape: f32[4,64], index: 1, kind: input, shape index: {}]
  %s2 = inlined_call_operand.vmem [shape: f32[64,4], index: 2, kind: input, shape index: {}]
  %s3 = inlined_call_operand.vmem [shape: f32[2,64,1], index: 3, kind: output, shape index: {}]
  %s4 = sld [smem:[#allocation0]]
  $region49: #{tpu_custom_call.1} parent=0
    _
  %s6 = ssub.s32 1, %s4
  %s7 = scalar_select 0, %s6, %s4
  $region1: #{tpu_custom_call.1} parent=0
    #allocation2 [shape = 'u8[131072]{0}', space=vmem, size = 0x20000, scoped, tag = 'input window, operand 0']
    #allocation3 [shape = 's32[2]{0}', space=sflag, size = 0x8, scoped, tag = 'scoped memory for tpu_custom_call.1']
    %8 = vsyncpa [#allocation3], 0
    %s9 = scalar_lea.sflag [#allocation3], 1
    %10 = vsyncpa %s9, 0
    loop: start=0, step=1, limit=4
    $region2: #{tpu_custom_call.1} parent=1 // loop_pre_header
      _
    $region3: #{tpu_custom_call.1} parent=1 // loop_header
      %s12 = sphi 0, %s16
      %p13 = scmp.ge.s32.totalorder %s12, 4
      %s22 = sphi 0, %s24
      %s25 = sphi 0, %s22
      %s26 = sphi 0, %s25
      %s42 = sphi 0, %s26
      %s46 = sphi 0, %s46
      %s48 = sphi 0, %s46
      %s49 = sphi 0, %s48
      %s63 = sphi 0, %s49
      %s67 = sphi 0, %s67
      %s69 = sphi 0, %s67
      %s70 = sphi 0, %s69
      %s84 = sphi 0, %s70
      %s90 = sphi 0, %s92
      %s93 = sphi 0, %s90
      %s94 = sphi 0, %s93
      %s110 = sphi 0, %s94
    $region4: #{tpu_custom_call.1} parent=1 // loop_header_branch
      %15 = sbr.rel (%p13) target = $region8
    $region5: #{tpu_custom_call.1} parent=1 // loop_body
      %s17 = ssub.s32 %s12, 1
      %s18 = ssub.s32 %s12, 2
      %s19 = sadd.s32 %s12, 1
      %s20 = ssub.s32 %s12, %s19
      %p21 = scmp.eq.s32.totalorder %s20, 0
      %s23 = sadd.s32 %s22, 1
      %s24 = scalar_select %p21, %s22, %s23
      %p27 = pneg %p21
      %p28 = scmp.eq.s32.totalorder %s12, 1
      %p29 = por %p27, %p28
      %p30 = scmp.ne.s32.totalorder %s22, %s25
      %p31 = scmp.eq.s32.totalorder %s12, 0
      %p32 = por %p30, %p31
      %p33 = scmp.ne.s32.totalorder %s22, %s25
      %p34 = scmp.eq.s32.totalorder %s17, 1
      %p35 = por %p33, %p34
      %p36 = scmp.ne.s32.totalorder %s25, %s26
      %p37 = scmp.eq.s32.totalorder %s17, 0
      %p38 = por %p36, %p37
      %p39 = scmp.ne.s32.totalorder %s25, %s26
      %p40 = scmp.eq.s32.totalorder %s18, 1
      %p41 = por %p39, %p40
      %p43 = scmp.ne.s32.totalorder %s26, %s42
      %p44 = scmp.eq.s32.totalorder %s18, 0
      %p45 = por %p43, %p44
      %s47 = sadd.s32 %s46, 1
      %p50 = scmp.eq.s32.totalorder %s12, 1
      %p51 = scmp.ne.s32.totalorder %s46, %s48
      %p52 = scmp.eq.s32.totalorder %s12, 0
      %p53 = por %p51, %p52
      %p54 = scmp.ne.s32.totalorder %s46, %s48
      %p55 = scmp.eq.s32.totalorder %s17, 1
      %p56 = por %p54, %p55
      %p57 = scmp.ne.s32.totalorder %s48, %s49
      %p58 = scmp.eq.s32.totalorder %s17, 0
      %p59 = por %p57, %p58
      %p60 = scmp.ne.s32.totalorder %s48, %s49
      %p61 = scmp.eq.s32.totalorder %s18, 1
      %p62 = por %p60, %p61
      %p64 = scmp.ne.s32.totalorder %s49, %s63
      %p65 = scmp.eq.s32.totalorder %s18, 0
      %p66 = por %p64, %p65
      %s68 = sadd.s32 %s67, 1
      %p71 = scmp.eq.s32.totalorder %s12, 1
      %p72 = scmp.ne.s32.totalorder %s67, %s69
      %p73 = scmp.eq.s32.totalorder %s12, 0
      %p74 = por %p72, %p73
      %p75 = scmp.ne.s32.totalorder %s67, %s69
      %p76 = scmp.eq.s32.totalorder %s17, 1
      %p77 = por %p75, %p76
      %p78 = scmp.ne.s32.totalorder %s69, %s70
      %p79 = scmp.eq.s32.totalorder %s17, 0
      %p80 = por %p78, %p79
      %p81 = scmp.ne.s32.totalorder %s69, %s70
      %p82 = scmp.eq.s32.totalorder %s18, 1
      %p83 = por %p81, %p82
      %p85 = scmp.ne.s32.totalorder %s70, %s84
      %p86 = scmp.eq.s32.totalorder %s18, 0
      %p87 = por %p85, %p86
      %s88 = ssub.s32 %s12, %s19
      %p89 = scmp.eq.s32.totalorder %s88, 0
      %s91 = sadd.s32 %s90, 1
      %s92 = scalar_select %p89, %s90, %s91
      %p95 = pneg %p89
      %p96 = scmp.eq.s32.totalorder %s12, 1
      %p97 = por %p95, %p96
      %p98 = scmp.ne.s32.totalorder %s90, %s93
      %p99 = scmp.eq.s32.totalorder %s12, 0
      %p100 = por %p98, %p99
      %p101 = scmp.ne.s32.totalorder %s90, %s93
      %p102 = scmp.eq.s32.totalorder %s17, 1
      %p103 = por %p101, %p102
      %p104 = scmp.ne.s32.totalorder %s93, %s94
      %p105 = scmp.eq.s32.totalorder %s17, 0
      %p106 = por %p104, %p105
      %p107 = scmp.ne.s32.totalorder %s93, %s94
      %p108 = scmp.eq.s32.totalorder %s18, 1
      %p109 = por %p107, %p108
      %p111 = scmp.ne.s32.totalorder %s94, %s110
      %p112 = scmp.eq.s32.totalorder %s18, 0
      %p113 = por %p111, %p112
      %p114 = scmp.le.s32.totalorder 1, %s12
      %p115 = scmp.lt.s32.totalorder %s12, 3
      %p116 = pnand %p114, %p115
      %p117 = pneg %p116
      // Predicated region
      $region9: #{tpu_custom_call.1} parent=5 // pred_check
        _
      $region10: #{tpu_custom_call.1} parent=5 // pred_check_branch
        %119 = sbr.rel (%p116) target = $region12
      $region11: #{tpu_custom_call.1} parent=5 // pred_region
        %s120 = ssub.s32 %s12, 1
        // Predicated region
        $region13: #{tpu_custom_call.1} parent=11 // pred_check
          %p121 = pneg %p59
        $region14: #{tpu_custom_call.1} parent=11 // pred_check_branch
          %123 = sbr.rel (%p121) target = $region16
        $region15: #{tpu_custom_call.1} parent=11 // pred_region
          _
        $region16: #{tpu_custom_call.1} parent=11 // pred_fallthru
          _
        // Predicated region
        $region17: #{tpu_custom_call.1} parent=11 // pred_check
          %p124 = pneg %p80
        $region18: #{tpu_custom_call.1} parent=11 // pred_check_branch
          %126 = sbr.rel (%p124) target = $region20
        $region19: #{tpu_custom_call.1} parent=11 // pred_region
          _
        $region20: #{tpu_custom_call.1} parent=11 // pred_fallthru
          _
      $region12: #{tpu_custom_call.1} parent=5 // pred_fallthru
        _
      %p127 = scmp.lt.s32.totalorder %s12, 2
      // Predicated region
      $region21: #{tpu_custom_call.1} parent=5 // pred_check
        %p128 = pneg %p127
      $region22: #{tpu_custom_call.1} parent=5 // pred_check_branch
        %130 = sbr.rel (%p128) target = $region24
      $region23: #{tpu_custom_call.1} parent=5 // pred_region
        // Predicated region
        $region25: #{tpu_custom_call.1} parent=23 // pred_check
          %p131 = pneg %p32
        $region26: #{tpu_custom_call.1} parent=23 // pred_check_branch
          %133 = sbr.rel (%p131) target = $region28
        $region27: #{tpu_custom_call.1} parent=23 // pred_region
          %s134 = sand.u32 %s22, 1
          %s135 = scalar_lea.sflag [#allocation3], %s134
          %s136 = sand.u32 %s22, 1
          %s137 = smul.addr %s136, 128
          %s138 = scalar_lea.vmem [#allocation2], %s137
          %s140 = ssub.s32 2048, 2048
          %141 = vsyncadd %s135, %s140
          %s142 = smul.addr %s12, 16
          %s143 = smul.addr %s142, 128
          %s144 = scalar_lea.hbm %s0, %s143
          %s145 = sshll.u32 %s138, 4
          %s146 = int_to_ptr.vmem [resolvable:$true] %s145
          %151 = dma.hbm_to_vmem [thread:$0]  %s144, 2048, %s146, %s135, 256, 256, 16
        $region28: #{tpu_custom_call.1} parent=23 // pred_fallthru
          _
      $region24: #{tpu_custom_call.1} parent=5 // pred_fallthru
        _
      %p152 = scmp.le.s32.totalorder 1, %s12
      %p153 = scmp.lt.s32.totalorder %s12, 3
      %p154 = pnand %p152, %p153
      %p155 = pneg %p154
      // Predicated region
      $region29: #{tpu_custom_call.1} parent=5 // pred_check
        _
      $region30: #{tpu_custom_call.1} parent=5 // pred_check_branch
        %157 = sbr.rel (%p154) target = $region32
      $region31: #{tpu_custom_call.1} parent=5 // pred_region
        %s158 = ssub.s32 %s12, 1
        %s159 = sand.u32 %s25, 1
        %s160 = scalar_lea.sflag [#allocation3], %s159
        %s161 = sand.u32 %s25, 1
        %s162 = smul.addr %s161, 128
        %s163 = scalar_lea.vmem [#allocation2], %s162
        // Predicated region
        $region33: #{tpu_custom_call.1} parent=31 // pred_check
          %p164 = pneg %p38
        $region34: #{tpu_custom_call.1} parent=31 // pred_check_branch
          %166 = sbr.rel (%p164) target = $region36
        $region35: #{tpu_custom_call.1} parent=31 // pred_region
          %167 = dma.done %s160, 2048
        $region36: #{tpu_custom_call.1} parent=31 // pred_fallthru
          _
        %s168 = sand.u32 %s25, 1
        %s169 = scalar_lea.sflag [#allocation3], %s168
        %s170 = sand.u32 %s25, 1
        %s171 = smul.addr %s170, 128
        %s172 = scalar_lea.vmem [#allocation2], %s171
        %p173 = pneg %p38
        %p174 = pneg %p35
        %p175 = pneg %p59
        %p176 = pneg %p56
        %p177 = pneg %p80
        %p178 = pneg %p77
        %p179 = pneg %p106
        %p180 = pneg %p103
        %p181 = scmp.lt.s32.totalorder %s17, 1
        %s182 = scalar_select %p181, %s17, 1
        %s183 = smul.addr %s182, 8
        %s184 = smul.addr %s183, 8
        %s185 = scalar_lea.vmem %s3, %s184
        %p186 = scmp.lt.s32.totalorder %s17, 1
        %s187 = scalar_select %p186, %s17, 1
        %s188 = smul.addr %s187, 8
        %s189 = smul.addr %s188, 8
        %s190 = scalar_lea.vmem %s3, %s189
        %v191 = vld [vmem:[%s163] sm:$0xff]
        %v192 = vld [vmem:[%s163 + $0x8] sm:$0xff]
        %v193 = vld [vmem:[%s163 + $0x10] sm:$0xff]
        %v194 = vld [vmem:[%s163 + $0x18] sm:$0xff]
        %v195 = vld [vmem:[%s163 + $0x20] sm:$0xff]
        %v196 = vld [vmem:[%s163 + $0x28] sm:$0xff]
        %v197 = vld [vmem:[%s163 + $0x30] sm:$0xff]
        %v198 = vld [vmem:[%s163 + $0x38] sm:$0xff]
        %v199 = vld [vmem:[%s163 + $0x40] sm:$0xff]
        %v200 = vld [vmem:[%s163 + $0x48] sm:$0xff]
        %v201 = vld [vmem:[%s163 + $0x50] sm:$0xff]
        %v202 = vld [vmem:[%s163 + $0x58] sm:$0xff]
        %v203 = vld [vmem:[%s163 + $0x60] sm:$0xff]
        %v204 = vld [vmem:[%s163 + $0x68] sm:$0xff]
        %v205 = vld [vmem:[%s163 + $0x70] sm:$0xff]
        %v206 = vld [vmem:[%s163 + $0x78] sm:$0xff]
        %v207 = vadd.f32 %v191, %v192
        %208 = vadd.xlane.f32.xlu0 %v207
        %v209 = vpop.xlane.xlu0 %208
        %v210 = vadd.f32 %v193, %v194
        %211 = vadd.xlane.f32.xlu0 %v210
        %v212 = vpop.xlane.xlu0 %211
        %v213 = vadd.f32 %v195, %v196
        %214 = vadd.xlane.f32.xlu0 %v213
        %v215 = vpop.xlane.xlu0 %214
        %v216 = vadd.f32 %v197, %v198
        %217 = vadd.xlane.f32.xlu0 %v216
        %v218 = vpop.xlane.xlu0 %217
        %v219 = vadd.f32 %v199, %v200
        %220 = vadd.xlane.f32.xlu0 %v219
        %v221 = vpop.xlane.xlu0 %220
        %v222 = vadd.f32 %v201, %v202
        %223 = vadd.xlane.f32.xlu0 %v222
        %v224 = vpop.xlane.xlu0 %223
        %v225 = vadd.f32 %v203, %v204
        %226 = vadd.xlane.f32.xlu0 %v225
        %v227 = vpop.xlane.xlu0 %226
        %v228 = vadd.f32 %v205, %v206
        %229 = vadd.xlane.f32.xlu0 %v228
        %v230 = vpop.xlane.xlu0 %229
        %v231 = vmul.f32 %v209, 0.00390625
        %v232 = vmul.f32 %v212, 0.00390625
        %v233 = vmul.f32 %v215, 0.00390625
        %v234 = vmul.f32 %v218, 0.00390625
        %v235 = vmul.f32 %v221, 0.00390625
        %v236 = vmul.f32 %v224, 0.00390625
        %v237 = vmul.f32 %v227, 0.00390625
        %v238 = vmul.f32 %v230, 0.00390625
        %v239 = vmax.f32 %v191, %v192
        %240 = vmax.xlane.f32.xlu0 %v239
        %v241 = vpop.xlane.xlu0 %240
        %v242 = vmax.f32 %v193, %v194
        %243 = vmax.xlane.f32.xlu0 %v242
        %v244 = vpop.xlane.xlu0 %243
        %v245 = vmax.f32 %v195, %v196
        %246 = vmax.xlane.f32.xlu0 %v245
        %v247 = vpop.xlane.xlu0 %246
        %v248 = vmax.f32 %v197, %v198
        %249 = vmax.xlane.f32.xlu0 %v248
        %v250 = vpop.xlane.xlu0 %249
        %v251 = vmax.f32 %v199, %v200
        %252 = vmax.xlane.f32.xlu0 %v251
        %v253 = vpop.xlane.xlu0 %252
        %v254 = vmax.f32 %v201, %v202
        %255 = vmax.xlane.f32.xlu0 %v254
        %v256 = vpop.xlane.xlu0 %255
        %v257 = vmax.f32 %v203, %v204
        %258 = vmax.xlane.f32.xlu0 %v257
        %v259 = vpop.xlane.xlu0 %258
        %v260 = vmax.f32 %v205, %v206
        %261 = vmax.xlane.f32.xlu0 %v260
        %v262 = vpop.xlane.xlu0 %261
        %v263 = vld [vmem:[%s1] sm:$0xf]
        %v264 = vld [vmem:[%s2] sm:$0xff]
        %v265 = vld [vmem:[%s2 + $0x8] sm:$0xff]
        %v266 = vld [vmem:[%s2 + $0x10] sm:$0xff]
        %v267 = vld [vmem:[%s2 + $0x18] sm:$0xff]
        %v268 = vld [vmem:[%s2 + $0x20] sm:$0xff]
        %v269 = vld [vmem:[%s2 + $0x28] sm:$0xff]
        %v270 = vld [vmem:[%s2 + $0x30] sm:$0xff]
        %v271 = vld [vmem:[%s2 + $0x38] sm:$0xff]
        %vm272 = vcmask 523264
        %v274 = vsel %vm272, %v263, 0
        %276 = vmatprep.subr.mxu0 0.0
        %277 = vmatpush1.msra.mxu0 %v231
        %278 = vmatprep.subr.mxu0 0.0
        %279 = vmatpush1.msra.mxu0 %v232
        %280 = vmatprep.subr.mxu0 0.0
        %281 = vmatpush1.msra.mxu0 %v233
        %282 = vmatprep.subr.mxu0 0.0
        %283 = vmatpush1.msra.mxu0 %v234
        %284 = vmatprep.subr.mxu0 0.0
        %285 = vmatpush1.msra.mxu0 %v235
        %286 = vmatprep.subr.mxu0 0.0
        %287 = vmatpush1.msra.mxu0 %v236
        %288 = vmatprep.subr.mxu0 0.0
        %289 = vmatpush1.msra.mxu0 %v237
        %290 = vmatprep.subr.mxu0 0.0
        %291 = vmatpush1.msra.mxu0 %v238
        %292 = vmatprep.subr.mxu0 0.0
        %293 = vmatpush1.msra.mxu0 0.0
        %294 = vmatprep.subr.mxu0 0.0
        %295 = vmatpush1.msra.mxu0 0.0
        %296 = vmatprep.subr.mxu0 0.0
        %297 = vmatpush1.msra.mxu0 0.0
        %298 = vmatprep.subr.mxu0 0.0
        %299 = vmatpush1.msra.mxu0 0.0
        %300 = vmatprep.subr.mxu0 0.0
        %301 = vmatpush1.msra.mxu0 0.0
        %302 = vmatprep.subr.mxu0 0.0
        %303 = vmatpush1.msra.mxu0 0.0
        %304 = vmatprep.subr.mxu0 0.0
        %305 = vmatpush1.msra.mxu0 0.0
        %306 = vmatprep.subr.mxu0 0.0
        %307 = vmatpush1.msra.mxu0 0.0
        %308 = vmatprep.subr.mxu0 0.0
        %309 = vmatpush1.msra.mxu0 0.0
        %310 = vmatprep.subr.mxu0 0.0
        %311 = vmatpush1.msra.mxu0 0.0
        %312 = vmatprep.subr.mxu0 0.0
        %313 = vmatpush1.msra.mxu0 0.0
        %314 = vmatprep.subr.mxu0 0.0
        %315 = vmatpush1.msra.mxu0 0.0
        %316 = vmatprep.subr.mxu0 0.0
        %317 = vmatpush1.msra.mxu0 0.0
        %318 = vmatprep.subr.mxu0 0.0
        %319 = vmatpush1.msra.mxu0 0.0
        %320 = vmatprep.subr.mxu0 0.0
        %321 = vmatpush1.msra.mxu0 0.0
        %322 = vmatprep.subr.mxu0 0.0
        %323 = vmatpush1.msra.mxu0 0.0
        %324 = vmatprep.subr.mxu0 0.0
        %325 = vmatpush1.msra.mxu0 0.0
        %326 = vmatprep.subr.mxu0 0.0
        %327 = vmatpush1.msra.mxu0 0.0
        %328 = vmatprep.subr.mxu0 0.0
        %329 = vmatpush1.msra.mxu0 0.0
        %330 = vmatprep.subr.mxu0 0.0
        %331 = vmatpush1.msra.mxu0 0.0
        %332 = vmatprep.subr.mxu0 0.0
        %333 = vmatpush1.msra.mxu0 0.0
        %334 = vmatprep.subr.mxu0 0.0
        %335 = vmatpush1.msra.mxu0 0.0
        %336 = vmatprep.subr.mxu0 0.0
        %337 = vmatpush1.msra.mxu0 0.0
        %338 = vmatprep.subr.mxu0 0.0
        %339 = vmatpush1.msra.mxu0 0.0
        %340 = vmatprep.mubr.f32.mxu0 0.0
        %341 = vmatmul.mubr.f32.gmra.mrb[0].mxu0 %v274
        %v342 = vpop.f32.mrb[0].mxu0
        %v343 = vadd.f32 0.0, %v342
        %v344 = vpop.f32.mrb[0].mxu0
        %345 = vdwg.mxu0
        %v346 = vmax.f32 %v343, 0.0
        %347 = vmatprep.subr.mxu0 0.0
        %348 = vmatpush1.msra.mxu0 %v241
        %349 = vmatprep.subr.mxu0 0.0
        %350 = vmatpush1.msra.mxu0 %v244
        %351 = vmatprep.subr.mxu0 0.0
        %352 = vmatpush1.msra.mxu0 %v247
        %353 = vmatprep.subr.mxu0 0.0
        %354 = vmatpush1.msra.mxu0 %v250
        %355 = vmatprep.subr.mxu0 0.0
        %356 = vmatpush1.msra.mxu0 %v253
        %357 = vmatprep.subr.mxu0 0.0
        %358 = vmatpush1.msra.mxu0 %v256
        %359 = vmatprep.subr.mxu0 0.0
        %360 = vmatpush1.msra.mxu0 %v259
        %361 = vmatprep.subr.mxu0 0.0
        %362 = vmatpush1.msra.mxu0 %v262
        %363 = vmatprep.subr.mxu0 0.0
        %364 = vmatpush1.msra.mxu0 0.0
        %365 = vmatprep.subr.mxu0 0.0
        %366 = vmatpush1.msra.mxu0 0.0
        %367 = vmatprep.subr.mxu0 0.0
        %368 = vmatpush1.msra.mxu0 0.0
        %369 = vmatprep.subr.mxu0 0.0
        %370 = vmatpush1.msra.mxu0 0.0
        %371 = vmatprep.subr.mxu0 0.0
        %372 = vmatpush1.msra.mxu0 0.0
        %373 = vmatprep.subr.mxu0 0.0
        %374 = vmatpush1.msra.mxu0 0.0
        %375 = vmatprep.subr.mxu0 0.0
        %376 = vmatpush1.msra.mxu0 0.0
        %377 = vmatprep.subr.mxu0 0.0
        %378 = vmatpush1.msra.mxu0 0.0
        %379 = vmatprep.subr.mxu0 0.0
        %380 = vmatpush1.msra.mxu0 0.0
        %381 = vmatprep.subr.mxu0 0.0
        %382 = vmatpush1.msra.mxu0 0.0
        %383 = vmatprep.subr.mxu0 0.0
        %384 = vmatpush1.msra.mxu0 0.0
        %385 = vmatprep.subr.mxu0 0.0
        %386 = vmatpush1.msra.mxu0 0.0
        %387 = vmatprep.subr.mxu0 0.0
        %388 = vmatpush1.msra.mxu0 0.0
        %389 = vmatprep.subr.mxu0 0.0
        %390 = vmatpush1.msra.mxu0 0.0
        %391 = vmatprep.subr.mxu0 0.0
        %392 = vmatpush1.msra.mxu0 0.0
        %393 = vmatprep.subr.mxu0 0.0
        %394 = vmatpush1.msra.mxu0 0.0
        %395 = vmatprep.subr.mxu0 0.0
        %396 = vmatpush1.msra.mxu0 0.0
        %397 = vmatprep.subr.mxu0 0.0
        %398 = vmatpush1.msra.mxu0 0.0
        %399 = vmatprep.subr.mxu0 0.0
        %400 = vmatpush1.msra.mxu0 0.0
        %401 = vmatprep.subr.mxu0 0.0
        %402 = vmatpush1.msra.mxu0 0.0
        %403 = vmatprep.subr.mxu0 0.0
        %404 = vmatpush1.msra.mxu0 0.0
        %405 = vmatprep.subr.mxu0 0.0
        %406 = vmatpush1.msra.mxu0 0.0
        %407 = vmatprep.subr.mxu0 0.0
        %408 = vmatpush1.msra.mxu0 0.0
        %409 = vmatprep.subr.mxu0 0.0
        %410 = vmatpush1.msra.mxu0 0.0
        %411 = vmatprep.mubr.f32.mxu0 0.0
        %412 = vmatmul.mubr.f32.gmra.mrb[0].mxu0 %v274
        %v413 = vpop.f32.mrb[0].mxu0
        %v414 = vadd.f32 0.0, %v413
        %v415 = vpop.f32.mrb[0].mxu0
        %416 = vdwg.mxu0
        %v417 = vmax.f32 %v414, 0.0
        %vm418 = vcmask 31744
        %v420 = vsel %vm418, %v264, 0
        %v423 = vsel %vm418, %v265, 0
        %v426 = vsel %vm418, %v266, 0
        %v429 = vsel %vm418, %v267, 0
        %v432 = vsel %vm418, %v268, 0
        %v435 = vsel %vm418, %v269, 0
        %v438 = vsel %vm418, %v270, 0
        %v441 = vsel %vm418, %v271, 0
        %vm443 = vcmask 1043456
        %v445 = vsel %vm443, %v417, 0
        %447 = vmatprep.subr.mxu0 0.0
        %448 = vmatpush1.msra.mxu0 %v445
        %449 = vmatprep.subr.mxu0 0.0
        %450 = vmatpush1.msra.mxu0 0.0
        %451 = vmatprep.subr.mxu0 0.0
        %452 = vmatpush1.msra.mxu0 0.0
        %453 = vmatprep.subr.mxu0 0.0
        %454 = vmatpush1.msra.mxu0 0.0
        %455 = vmatprep.subr.mxu0 0.0
        %456 = vmatpush1.msra.mxu0 0.0
        %457 = vmatprep.subr.mxu0 0.0
        %458 = vmatpush1.msra.mxu0 0.0
        %459 = vmatprep.subr.mxu0 0.0
        %460 = vmatpush1.msra.mxu0 0.0
        %461 = vmatprep.subr.mxu0 0.0
        %462 = vmatpush1.msra.mxu0 0.0
        %463 = vmatprep.subr.mxu0 0.0
        %464 = vmatpush1.msra.mxu0 0.0
        %465 = vmatprep.subr.mxu0 0.0
        %466 = vmatpush1.msra.mxu0 0.0
        %467 = vmatprep.subr.mxu0 0.0
        %468 = vmatpush1.msra.mxu0 0.0
        %469 = vmatprep.subr.mxu0 0.0
        %470 = vmatpush1.msra.mxu0 0.0
        %471 = vmatprep.subr.mxu0 0.0
        %472 = vmatpush1.msra.mxu0 0.0
        %473 = vmatprep.subr.mxu0 0.0
        %474 = vmatpush1.msra.mxu0 0.0
        %475 = vmatprep.subr.mxu0 0.0
        %476 = vmatpush1.msra.mxu0 0.0
        %477 = vmatprep.subr.mxu0 0.0
        %478 = vmatpush1.msra.mxu0 0.0
        %479 = vmatprep.subr.mxu0 0.0
        %480 = vmatpush1.msra.mxu0 0.0
        %481 = vmatprep.subr.mxu0 0.0
        %482 = vmatpush1.msra.mxu0 0.0
        %483 = vmatprep.subr.mxu0 0.0
        %484 = vmatpush1.msra.mxu0 0.0
        %485 = vmatprep.subr.mxu0 0.0
        %486 = vmatpush1.msra.mxu0 0.0
        %487 = vmatprep.subr.mxu0 0.0
        %488 = vmatpush1.msra.mxu0 0.0
        %489 = vmatprep.subr.mxu0 0.0
        %490 = vmatpush1.msra.mxu0 0.0
        %491 = vmatprep.subr.mxu0 0.0
        %492 = vmatpush1.msra.mxu0 0.0
        %493 = vmatprep.subr.mxu0 0.0
        %494 = vmatpush1.msra.mxu0 0.0
        %495 = vmatprep.subr.mxu0 0.0
        %496 = vmatpush1.msra.mxu0 0.0
        %497 = vmatprep.subr.mxu0 0.0
        %498 = vmatpush1.msra.mxu0 0.0
        %499 = vmatprep.subr.mxu0 0.0
        %500 = vmatpush1.msra.mxu0 0.0
        %501 = vmatprep.subr.mxu0 0.0
        %502 = vmatpush1.msra.mxu0 0.0
        %503 = vmatprep.subr.mxu0 0.0
        %504 = vmatpush1.msra.mxu0 0.0
        %505 = vmatprep.subr.mxu0 0.0
        %506 = vmatpush1.msra.mxu0 0.0
        %507 = vmatprep.subr.mxu0 0.0
        %508 = vmatpush1.msra.mxu0 0.0
        %509 = vmatprep.subr.mxu0 0.0
        %510 = vmatpush1.msra.mxu0 0.0
        %511 = vmatprep.mubr.f32.mxu0 0.0
        %512 = vmatmul.mubr.f32.gmra.mrb[0].mxu0 %v420
        %v513 = vpop.f32.mrb[0].mxu0
        %v514 = vadd.f32 0.0, %v513
        %v515 = vpop.f32.mrb[0].mxu0
        %516 = vmatprep.mubr.f32.mxu0 0.0
        %517 = vmatmul.mubr.f32.gmra.mrb[0].mxu0 %v423
        %v518 = vpop.f32.mrb[0].mxu0
        %v519 = vadd.f32 0.0, %v518
        %v520 = vpop.f32.mrb[0].mxu0
        %521 = vmatprep.mubr.f32.mxu0 0.0
        %522 = vmatmul.mubr.f32.gmra.mrb[0].mxu0 %v426
        %v523 = vpop.f32.mrb[0].mxu0
        %v524 = vadd.f32 0.0, %v523
        %v525 = vpop.f32.mrb[0].mxu0
        %526 = vmatprep.mubr.f32.mxu0 0.0
        %527 = vmatmul.mubr.f32.gmra.mrb[0].mxu0 %v429
        %v528 = vpop.f32.mrb[0].mxu0
        %v529 = vadd.f32 0.0, %v528
        %v530 = vpop.f32.mrb[0].mxu0
        %531 = vmatprep.mubr.f32.mxu0 0.0
        %532 = vmatmul.mubr.f32.gmra.mrb[0].mxu0 %v432
        %v533 = vpop.f32.mrb[0].mxu0
        %v534 = vadd.f32 0.0, %v533
        %v535 = vpop.f32.mrb[0].mxu0
        %536 = vmatprep.mubr.f32.mxu0 0.0
        %537 = vmatmul.mubr.f32.gmra.mrb[0].mxu0 %v435
        %v538 = vpop.f32.mrb[0].mxu0
        %v539 = vadd.f32 0.0, %v538
        %v540 = vpop.f32.mrb[0].mxu0
        %541 = vmatprep.mubr.f32.mxu0 0.0
        %542 = vmatmul.mubr.f32.gmra.mrb[0].mxu0 %v438
        %v543 = vpop.f32.mrb[0].mxu0
        %v544 = vadd.f32 0.0, %v543
        %v545 = vpop.f32.mrb[0].mxu0
        %546 = vmatprep.mubr.f32.mxu0 0.0
        %547 = vmatmul.mubr.f32.gmra.mrb[0].mxu0 %v441
        %v548 = vpop.f32.mrb[0].mxu0
        %v549 = vadd.f32 0.0, %v548
        %v550 = vpop.f32.mrb[0].mxu0
        %551 = vdwg.mxu0
        %v553 = vsel %vm443, %v346, 0
        %555 = vmatprep.subr.mxu0 0.0
        %556 = vmatpush1.msra.mxu0 %v553
        %557 = vmatprep.subr.mxu0 0.0
        %558 = vmatpush1.msra.mxu0 0.0
        %559 = vmatprep.subr.mxu0 0.0
        %560 = vmatpush1.msra.mxu0 0.0
        %561 = vmatprep.subr.mxu0 0.0
        %562 = vmatpush1.msra.mxu0 0.0
        %563 = vmatprep.subr.mxu0 0.0
        %564 = vmatpush1.msra.mxu0 0.0
        %565 = vmatprep.subr.mxu0 0.0
        %566 = vmatpush1.msra.mxu0 0.0
        %567 = vmatprep.subr.mxu0 0.0
        %568 = vmatpush1.msra.mxu0 0.0
        %569 = vmatprep.subr.mxu0 0.0
        %570 = vmatpush1.msra.mxu0 0.0
        %571 = vmatprep.subr.mxu0 0.0
        %572 = vmatpush1.msra.mxu0 0.0
        %573 = vmatprep.subr.mxu0 0.0
        %574 = vmatpush1.msra.mxu0 0.0
        %575 = vmatprep.subr.mxu0 0.0
        %576 = vmatpush1.msra.mxu0 0.0
        %577 = vmatprep.subr.mxu0 0.0
        %578 = vmatpush1.msra.mxu0 0.0
        %579 = vmatprep.subr.mxu0 0.0
        %580 = vmatpush1.msra.mxu0 0.0
        %581 = vmatprep.subr.mxu0 0.0
        %582 = vmatpush1.msra.mxu0 0.0
        %583 = vmatprep.subr.mxu0 0.0
        %584 = vmatpush1.msra.mxu0 0.0
        %585 = vmatprep.subr.mxu0 0.0
        %586 = vmatpush1.msra.mxu0 0.0
        %587 = vmatprep.subr.mxu0 0.0
        %588 = vmatpush1.msra.mxu0 0.0
        %589 = vmatprep.subr.mxu0 0.0
        %590 = vmatpush1.msra.mxu0 0.0
        %591 = vmatprep.subr.mxu0 0.0
        %592 = vmatpush1.msra.mxu0 0.0
        %593 = vmatprep.subr.mxu0 0.0
        %594 = vmatpush1.msra.mxu0 0.0
        %595 = vmatprep.subr.mxu0 0.0
        %596 = vmatpush1.msra.mxu0 0.0
        %597 = vmatprep.subr.mxu0 0.0
        %598 = vmatpush1.msra.mxu0 0.0
        %599 = vmatprep.subr.mxu0 0.0
        %600 = vmatpush1.msra.mxu0 0.0
        %601 = vmatprep.subr.mxu0 0.0
        %602 = vmatpush1.msra.mxu0 0.0
        %603 = vmatprep.subr.mxu0 0.0
        %604 = vmatpush1.msra.mxu0 0.0
        %605 = vmatprep.subr.mxu0 0.0
        %606 = vmatpush1.msra.mxu0 0.0
        %607 = vmatprep.subr.mxu0 0.0
        %608 = vmatpush1.msra.mxu0 0.0
        %609 = vmatprep.subr.mxu0 0.0
        %610 = vmatpush1.msra.mxu0 0.0
        %611 = vmatprep.subr.mxu0 0.0
        %612 = vmatpush1.msra.mxu0 0.0
        %613 = vmatprep.subr.mxu0 0.0
        %614 = vmatpush1.msra.mxu0 0.0
        %615 = vmatprep.subr.mxu0 0.0
        %616 = vmatpush1.msra.mxu0 0.0
        %617 = vmatprep.subr.mxu0 0.0
        %618 = vmatpush1.msra.mxu0 0.0
        %619 = vmatprep.mubr.f32.mxu0 0.0
        %620 = vmatmul.mubr.f32.gmra.mrb[0].mxu0 %v420
        %v621 = vpop.f32.mrb[0].mxu0
        %v622 = vadd.f32 %v514, %v621
        %v623 = vpop.f32.mrb[0].mxu0
        %624 = vmatprep.mubr.f32.mxu0 0.0
        %625 = vmatmul.mubr.f32.gmra.mrb[0].mxu0 %v423
        %v626 = vpop.f32.mrb[0].mxu0
        %v627 = vadd.f32 %v519, %v626
        %v628 = vpop.f32.mrb[0].mxu0
        %629 = vmatprep.mubr.f32.mxu0 0.0
        %630 = vmatmul.mubr.f32.gmra.mrb[0].mxu0 %v426
        %v631 = vpop.f32.mrb[0].mxu0
        %v632 = vadd.f32 %v524, %v631
        %v633 = vpop.f32.mrb[0].mxu0
        %634 = vmatprep.mubr.f32.mxu0 0.0
        %635 = vmatmul.mubr.f32.gmra.mrb[0].mxu0 %v429
        %v636 = vpop.f32.mrb[0].mxu0
        %v637 = vadd.f32 %v529, %v636
        %v638 = vpop.f32.mrb[0].mxu0
        %639 = vmatprep.mubr.f32.mxu0 0.0
        %640 = vmatmul.mubr.f32.gmra.mrb[0].mxu0 %v432
        %v641 = vpop.f32.mrb[0].mxu0
        %v642 = vadd.f32 %v534, %v641
        %v643 = vpop.f32.mrb[0].mxu0
        %644 = vmatprep.mubr.f32.mxu0 0.0
        %645 = vmatmul.mubr.f32.gmra.mrb[0].mxu0 %v435
        %v646 = vpop.f32.mrb[0].mxu0
        %v647 = vadd.f32 %v539, %v646
        %v648 = vpop.f32.mrb[0].mxu0
        %649 = vmatprep.mubr.f32.mxu0 0.0
        %650 = vmatmul.mubr.f32.gmra.mrb[0].mxu0 %v438
        %v651 = vpop.f32.mrb[0].mxu0
        %v652 = vadd.f32 %v544, %v651
        %v653 = vpop.f32.mrb[0].mxu0
        %654 = vmatprep.mubr.f32.mxu0 0.0
        %655 = vmatmul.mubr.f32.gmra.mrb[0].mxu0 %v441
        %v656 = vpop.f32.mrb[0].mxu0
        %v657 = vadd.f32 %v549, %v656
        %v658 = vpop.f32.mrb[0].mxu0
        %659 = vdwg.mxu0
        %v660 = vsub.f32 0.0, %v622
        %v661 = vsub.f32 0.0, %v627
        %v662 = vsub.f32 0.0, %v632
        %v663 = vsub.f32 0.0, %v637
        %v664 = vsub.f32 0.0, %v642
        %v665 = vsub.f32 0.0, %v647
        %v666 = vsub.f32 0.0, %v652
        %v667 = vsub.f32 0.0, %v657
        %v668 = vmul.f32 %v660, 1.442695
        %v669 = vpow.pop %v668
        %v670 = vmul.f32 %v661, 1.442695
        %v671 = vpow.pop %v670
        %v672 = vmul.f32 %v662, 1.442695
        %v673 = vpow.pop %v672
        %v674 = vmul.f32 %v663, 1.442695
        %v675 = vpow.pop %v674
        %v676 = vmul.f32 %v664, 1.442695
        %v677 = vpow.pop %v676
        %v678 = vmul.f32 %v665, 1.442695
        %v679 = vpow.pop %v678
        %v680 = vmul.f32 %v666, 1.442695
        %v681 = vpow.pop %v680
        %v682 = vmul.f32 %v667, 1.442695
        %v683 = vpow.pop %v682
        %v684 = vadd.f32 %v669, 1.0
        %v685 = vadd.f32 %v671, 1.0
        %v686 = vadd.f32 %v673, 1.0
        %v687 = vadd.f32 %v675, 1.0
        %v688 = vadd.f32 %v677, 1.0
        %v689 = vadd.f32 %v679, 1.0
        %v690 = vadd.f32 %v681, 1.0
        %v691 = vadd.f32 %v683, 1.0
        %v692 = vrcp.pop %v684
        %v693 = vmul.f32 1.0, %v692
        %v694 = vrcp.pop %v685
        %v695 = vmul.f32 1.0, %v694
        %v696 = vrcp.pop %v686
        %v697 = vmul.f32 1.0, %v696
        %v698 = vrcp.pop %v687
        %v699 = vmul.f32 1.0, %v698
        %v700 = vrcp.pop %v688
        %v701 = vmul.f32 1.0, %v700
        %v702 = vrcp.pop %v689
        %v703 = vmul.f32 1.0, %v702
        %v704 = vrcp.pop %v690
        %v705 = vmul.f32 1.0, %v704
        %v706 = vrcp.pop %v691
        %v707 = vmul.f32 1.0, %v706
        %vm708 = vcmask 7168
        %709 = vst.msk [vmem:[%s190] sm:$0xff] %vm708, %v693
        %710 = vst.msk [vmem:[%s190 + $0x8] sm:$0xff] %vm708, %v695
        %711 = vst.msk [vmem:[%s190 + $0x10] sm:$0xff] %vm708, %v697
        %712 = vst.msk [vmem:[%s190 + $0x18] sm:$0xff] %vm708, %v699
        %713 = vst.msk [vmem:[%s190 + $0x20] sm:$0xff] %vm708, %v701
        %714 = vst.msk [vmem:[%s190 + $0x28] sm:$0xff] %vm708, %v703
        %715 = vst.msk [vmem:[%s190 + $0x30] sm:$0xff] %vm708, %v705
        %716 = vst.msk [vmem:[%s190 + $0x38] sm:$0xff] %vm708, %v707
        %p717 = scmp.lt.s32.totalorder %s17, 1
        %s718 = scalar_select %p717, %s17, 1
        %s719 = smul.addr %s718, 8
        %s720 = smul.addr %s719, 8
        %s721 = scalar_lea.vmem %s3, %s720
        // Predicated region
        $region37: #{tpu_custom_call.1} parent=31 // pred_check
          %p722 = pneg %p103
        $region38: #{tpu_custom_call.1} parent=31 // pred_check_branch
          %724 = sbr.rel (%p722) target = $region40
        $region39: #{tpu_custom_call.1} parent=31 // pred_region
          _
        $region40: #{tpu_custom_call.1} parent=31 // pred_fallthru
          _
      $region32: #{tpu_custom_call.1} parent=5 // pred_fallthru
        _
      %p725 = scmp.le.s32.totalorder 2, %s12
      // Predicated region
      $region41: #{tpu_custom_call.1} parent=5 // pred_check
        %p726 = pneg %p725
      $region42: #{tpu_custom_call.1} parent=5 // pred_check_branch
        %728 = sbr.rel (%p726) target = $region44
      $region43: #{tpu_custom_call.1} parent=5 // pred_region
        %s729 = ssub.s32 %s12, 2
        // Predicated region
        $region45: #{tpu_custom_call.1} parent=43 // pred_check
          %p730 = pneg %p109
        $region46: #{tpu_custom_call.1} parent=43 // pred_check_branch
          %732 = sbr.rel (%p730) target = $region48
        $region47: #{tpu_custom_call.1} parent=43 // pred_region
          %p733 = scmp.lt.s32.totalorder %s18, 1
          %s734 = scalar_select %p733, %s18, 1
          %s735 = smul.addr %s734, 8
          %s736 = smul.addr %s735, 8
          %s737 = scalar_lea.vmem %s3, %s736
        $region48: #{tpu_custom_call.1} parent=43 // pred_fallthru
          _
      $region44: #{tpu_custom_call.1} parent=5 // pred_fallthru
        _
    $region6: #{tpu_custom_call.1} parent=1 // loop_footer
      %s16 = sadd.s32 1, %s12
    $region7: #{tpu_custom_call.1} parent=1 // loop_footer_branch
      %11 = sbr.rel target = $region3
    $region8: #{tpu_custom_call.1} parent=1 // loop_exit
      _
    %738 = vsyncpa [#allocation3], 1
    %s739 = scalar_lea.sflag [#allocation3], 1
    %740 = vsyncpa %s739, 1

</llo_original>
